<compile_context>
chip_gen: v7x
topology: tpu7x:2x2x1
jax: 0.10.0
libtpu: 0.0.40
codegen_flags: <defaults>
</compile_context>

<pallas_src>
import math
import functools

import jax
import jax.numpy as jnp
from jax import lax
from jax.experimental import pallas as pl
from jax.experimental.pallas import tpu as pltpu

_MIB = 1024 * 1024


def _resident_spec(block_shape, index_map):
    """BlockSpec for a grid-invariant operand (index_map never changes):
    single-buffer it so the second pipeline buffer doesn't waste VMEM."""
    try:
        return pl.BlockSpec(block_shape, index_map, pipeline_mode=pl.Buffered(1))
    except (TypeError, ValueError):
        # older BlockSpec signature without pipeline_mode -- fall back cleanly
        return pl.BlockSpec(block_shape, index_map)


# ----------------------------------------------------------------------------
# Kernel 1: tiled linear  y = x @ W + b    (W stored as (in, out) = PyTorch W.T)
# ----------------------------------------------------------------------------
def _linear_kernel(x_ref, w_ref, b_ref, o_ref):
    x = x_ref[...].astype(jnp.bfloat16)
    w = w_ref[...].astype(jnp.bfloat16)
    y = jnp.dot(x, w, preferred_element_type=jnp.float32) + b_ref[...]
    o_ref[...] = y.astype(o_ref.dtype)


def linear(x2d, w, b, out_dtype=jnp.float32, tm=512):
    """x2d: (M, Din), w: (Din, Dout), b: (Dout,) -> (M, Dout)."""
    M, Din = x2d.shape
    Dout = w.shape[1]
    tm = min(tm, M)
    return pl.pallas_call(
        _linear_kernel,
        out_shape=jax.ShapeDtypeStruct((M, Dout), out_dtype),
        grid_spec=pl.GridSpec(
            grid=(pl.cdiv(M, tm),),
            in_specs=[
                pl.BlockSpec((tm, Din), lambda i: (i, 0)),
                _resident_spec((Din, Dout), lambda i: (0, 0)),   # weight resident
                _resident_spec((1, Dout), lambda i: (0, 0)),     # bias resident
            ],
            out_specs=pl.BlockSpec((tm, Dout), lambda i: (i, 0)),
        ),
        compiler_params=pltpu.CompilerParams(
            dimension_semantics=("parallel",),
            vmem_limit_bytes=48 * _MIB,
        ),
    )(x2d, w, b.reshape(1, Dout))


# ----------------------------------------------------------------------------
# Kernel 2: fused Q/K/V projection (single launch, stacked resident weights)
# ----------------------------------------------------------------------------
def _qkv_proj_kernel(xq_ref, xk_ref, xv_ref, w_ref, b_ref, qo_ref, ko_ref, vo_ref):
    def proj(x_ref, idx, o_ref):
        x = x_ref[...].astype(jnp.bfloat16)
        w = w_ref[idx].astype(jnp.bfloat16)        # (D, D), VMEM-resident
        y = jnp.dot(x, w, preferred_element_type=jnp.float32) + b_ref[idx]
        o_ref[...] = y.astype(o_ref.dtype)

    proj(xq_ref, 0, qo_ref)
    proj(xk_ref, 1, ko_ref)
    proj(xv_ref, 2, vo_ref)


def qkv_projection(xq, xk, xv, w_stack, b_stack, tm=512):
    """xq/xk/xv: (M, D); w_stack: (3, D, D) bf16; b_stack: (3, 1, D) f32."""
    M, D = xq.shape
    tm = min(tm, M)
    x_spec = pl.BlockSpec((tm, D), lambda i: (i, 0))
    o_spec = pl.BlockSpec((tm, D), lambda i: (i, 0))
    out = jax.ShapeDtypeStruct((M, D), jnp.bfloat16)
    return pl.pallas_call(
        _qkv_proj_kernel,
        out_shape=(out, out, out),
        grid_spec=pl.GridSpec(
            grid=(pl.cdiv(M, tm),),
            in_specs=[
                x_spec, x_spec, x_spec,
                _resident_spec((3, D, D), lambda i: (0, 0, 0)),  # weights resident
                _resident_spec((3, 1, D), lambda i: (0, 0, 0)),  # biases resident
            ],
            out_specs=(o_spec, o_spec, o_spec),
        ),
        compiler_params=pltpu.CompilerParams(
            dimension_semantics=("parallel",),
            vmem_limit_bytes=48 * _MIB,
        ),
    )(xq, xk, xv, w_stack, b_stack)


# ----------------------------------------------------------------------------
# Kernel 3: scaled dot product attention, gridded over (batch, q-tile, head)
#   q/k/v arrive as (B, H, S, depth), so every grid step works on one
#   lane-contiguous per-head block delivered by the BlockSpec DMA.
#   mask/adjoin (if present) are fused additively in-kernel; their block index
#   is constant across the inner head axis, so they are fetched once per
#   (batch, q-tile).
# ----------------------------------------------------------------------------
def _mha_attention_kernel(*refs, has_mask, has_adjoin):
    it = iter(refs)
    q_ref, k_ref, v_ref = next(it), next(it), next(it)
    mask_ref = next(it) if has_mask else None
    adjoin_ref = next(it) if has_adjoin else None
    ctx_ref, attw_ref = next(it), next(it)

    q = q_ref[0, 0]            # (Tq, depth) bf16 (1/sqrt(depth) folded into wq)
    k = k_ref[0, 0]            # (Sk, depth) bf16
    v = v_ref[0, 0]            # (Sk, depth) bf16

    # QK^T without materializing K^T: contract the depth axis directly.
    logits = lax.dot_general(
        q, k, (((1,), (1,)), ((), ())),
        preferred_element_type=jnp.float32)          # (Tq, Sk) f32
    if has_mask:
        logits = logits + mask_ref[0, 0].astype(jnp.float32) * (-1000000000.0)
    if has_adjoin:
        logits = logits + adjoin_ref[0, 0].astype(jnp.float32)

    # numerically stable softmax in f32; exact reciprocal so the returned
    # attention weights are properly normalized (rows sum to ~1 in f32).
    m = jnp.max(logits, axis=-1, keepdims=True)
    e = jnp.exp(logits - m)
    attn = e * pl.reciprocal(jnp.sum(e, axis=-1, keepdims=True))

    attw_ref[0, 0] = attn.astype(attw_ref.dtype)
    ctx_ref[0, 0] = jnp.dot(attn.astype(jnp.bfloat16), v,
                            preferred_element_type=jnp.float32).astype(ctx_ref.dtype)


def mha_attention(qh, kh, vh, mask, adjoin, tq_max=256):
    """qh: (B, H, Sq, depth) bf16, kh/vh: (B, H, Sk, depth) bf16,
       mask/adjoin: (B, 1, Sq, Sk) or None."""
    B, H, Sq, depth = qh.shape
    Sk = kh.shape[2]

    # query-tile size: largest multiple of 8 (<= tq_max) that divides Sq
    if Sq <= tq_max:
        tq = Sq
    else:
        tq = Sq
        for cand in range(tq_max, 7, -8):
            if Sq % cand == 0:
                tq = cand
                break
    nq = Sq // tq

    kernel = functools.partial(_mha_attention_kernel,
                               has_mask=mask is not None,
                               has_adjoin=adjoin is not None)

    in_specs = [
        pl.BlockSpec((1, 1, tq, depth), lambda b, i, h: (b, h, i, 0)),
        pl.BlockSpec((1, 1, Sk, depth), lambda b, i, h: (b, h, 0, 0)),
        pl.BlockSpec((1, 1, Sk, depth), lambda b, i, h: (b, h, 0, 0)),
    ]
    inputs = [qh, kh, vh]
    # bias blocks are independent of the (innermost) head axis -> fetched once
    # per (batch, q-tile) thanks to the unchanged-block-index pipeline skip.
    bias_spec = pl.BlockSpec((1, 1, tq, Sk), lambda b, i, h: (b, 0, i, 0))
    if mask is not None:
        in_specs.append(bias_spec)
        inputs.append(mask)
    if adjoin is not None:
        in_specs.append(bias_spec)
        inputs.append(adjoin)

    return pl.pallas_call(
        kernel,
        out_shape=(
            jax.ShapeDtypeStruct((B, H, Sq, depth), jnp.bfloat16),
            jax.ShapeDtypeStruct((B, H, Sq, Sk), jnp.float32),
        ),
        grid_spec=pl.GridSpec(
            grid=(B, nq, H),          # head axis innermost: k/v blocks small,
            in_specs=in_specs,        # mask/adjoin reused across heads
            out_specs=(
                pl.BlockSpec((1, 1, tq, depth), lambda b, i, h: (b, h, i, 0)),
                pl.BlockSpec((1, 1, tq, Sk), lambda b, i, h: (b, h, i, 0)),
            ),
        ),
        compiler_params=pltpu.CompilerParams(
            dimension_semantics=("parallel", "parallel", "parallel"),
            vmem_limit_bytes=32 * _MIB,
        ),
    )(*inputs)


# ----------------------------------------------------------------------------
# MultiheadAttention forward (parameters passed explicitly)
# ----------------------------------------------------------------------------
def multihead_attention(params, q, k, v, mask, adjoin_matrix, num_heads):
    B, Sq, D = q.shape
    Sk = k.shape[1]
    depth = D // num_heads
    scale = 1.0 / math.sqrt(depth)

    # fold 1/sqrt(depth) into the q projection: exactly equivalent, removes a
    # per-element multiply (and a second bf16 rounding) inside the kernel.
    wq_w = params["wq_w"] * scale
    wq_b = params["wq_b"] * scale

    # Q/K/V projections
    if q.shape == k.shape == v.shape:
        w_qkv = jnp.stack([wq_w, params["wk_w"], params["wv_w"]]
                          ).astype(jnp.bfloat16)                     # (3, D, D)
        b_qkv = jnp.stack([wq_b, params["wk_b"], params["wv_b"]]
                          ).reshape(3, 1, D).astype(jnp.float32)     # (3, 1, D)
        qp, kp, vp = qkv_projection(q.reshape(B * Sq, D),
                                    k.reshape(B * Sk, D),
                                    v.reshape(B * Sk, D), w_qkv, b_qkv)
    else:
        # cross-attention with mismatched shapes: separate tiled GEMMs
        qp = linear(q.reshape(B * Sq, D), wq_w.astype(jnp.bfloat16),
                    wq_b, jnp.bfloat16)
        kp = linear(k.reshape(B * Sk, D), params["wk_w"].astype(jnp.bfloat16),
                    params["wk_b"], jnp.bfloat16)
        vp = linear(v.reshape(B * Sk, D), params["wv_w"].astype(jnp.bfloat16),
                    params["wv_b"], jnp.bfloat16)

    # split heads OUTSIDE the kernel (cheap XLA transpose on bf16): the
    # attention kernel then gets lane-contiguous per-head blocks via DMA and
    # never slices along the lane dimension.
    def split_heads(x2d, S):
        return x2d.reshape(B, S, num_heads, depth).transpose(0, 2, 1, 3)

    qh = split_heads(qp, Sq)
    kh = split_heads(kp, Sk)
    vh = split_heads(vp, Sk)

    # attention (ctx: (B, H, Sq, depth) bf16, attw: (B, H, Sq, Sk) f32)
    ctx, attn_weights = mha_attention(qh, kh, vh, mask, adjoin_matrix)

    # merge heads (cheap bf16 transpose) and run the output projection
    ctx2d = ctx.transpose(0, 2, 1, 3).reshape(B * Sq, D)
    out = linear(ctx2d, params["dense_w"].astype(jnp.bfloat16), params["dense_b"],
                 jnp.float32).reshape(B, Sq, D)
    return out, attn_weights


# ----------------------------------------------------------------------------
# Deterministic parameter init (PyTorch nn.Linear default: U(-1/sqrt(in), 1/sqrt(in)))
# Weights stored as (in, out) i.e. already-transposed PyTorch weight.
# ----------------------------------------------------------------------------
def init_params(key, d_model):
    bound = 1.0 / math.sqrt(d_model)
    keys = jax.random.split(key, 8)

    def u(k, shape):
        return jax.random.uniform(k, shape, jnp.float32, -bound, bound)

    return {
        "wq_w": u(keys[0], (d_model, d_model)), "wq_b": u(keys[1], (d_model,)),
        "wk_w": u(keys[2], (d_model, d_model)), "wk_b": u(keys[3], (d_model,)),
        "wv_w": u(keys[4], (d_model, d_model)), "wv_b": u(keys[5], (d_model,)),
        "dense_w": u(keys[6], (d_model, d_model)), "dense_b": u(keys[7], (d_model,)),
    }


# ----------------------------------------------------------------------------
# Plain-JAX reference (mirrors the PyTorch module) for a loose sanity check
# ----------------------------------------------------------------------------
def _reference_mha(params, q, k, v, mask, adjoin_matrix, num_heads):
    B, Sq, D = q.shape
    depth = D // num_heads

    def lin(x, w, b):
        return x @ w + b

    def split(x):
        B_, S_, _ = x.shape
        return x.reshape(B_, S_, num_heads, depth).transpose(0, 2, 1, 3)

    qh = split(lin(q, params["wq_w"], params["wq_b"]))
    kh = split(lin(k, params["wk_w"], params["wk_b"]))
    vh = split(lin(v, params["wv_w"], params["wv_b"]))
    logits = jnp.einsum("bhqd,bhkd->bhqk", qh, kh) / jnp.sqrt(jnp.float32(depth))
    if mask is not None:
        logits = logits + mask * (-1000000000.0)
    if adjoin_matrix is not None:
        logits = logits + adjoin_matrix
    w_ = jax.nn.softmax(logits, axis=-1)
    ctx = jnp.einsum("bhqk,bhkd->bhqd", w_, vh)
    ctx = ctx.transpose(0, 2, 1, 3).reshape(B, Sq, D)
    out = lin(ctx, params["dense_w"], params["dense_b"])
    return out, w_


if __name__ == "__main__":
    B, S, d_model, num_heads = 2, 8, 32, 4

    root = jax.random.PRNGKey(0)
    k_par, k_q, k_k, k_v, k_m, k_a = jax.random.split(root, 6)

    params = init_params(k_par, d_model)

    q = jax.random.normal(k_q, (B, S, d_model), jnp.float32)
    k = jax.random.normal(k_k, (B, S, d_model), jnp.float32)
    v = jax.random.normal(k_v, (B, S, d_model), jnp.float32)

    # additive-style mask (1 = masked out, broadcast over heads)
    mask = (jax.random.uniform(k_m, (B, 1, S, S)) > 0.8).astype(jnp.float32)
    adjoin_matrix = jax.random.normal(k_a, (B, 1, S, S), jnp.float32) * 0.1

    out, attn_w = multihead_attention(params, q, k, v, mask, adjoin_matrix, num_heads)
    jax.block_until_ready((out, attn_w))

    assert out.shape == (B, S, d_model)
    assert attn_w.shape == (B, num_heads, S, S)

    # sanity vs. plain-JAX reference (bf16 MXU operands -> loose tolerances)
    ref_out, ref_w = _reference_mha(params, q, k, v, mask, adjoin_matrix, num_heads)
    assert float(jnp.max(jnp.abs(attn_w - ref_w))) < 5e-2
    assert float(jnp.max(jnp.abs(out - ref_out))) < 1.5e-1

    print("KERNEL_OK")
</pallas_src>

<mosaic_0001>
module attributes {stable_mosaic.version = 11 : i64} {
  func.func @_qkv_proj_kernel(%arg0: i32, %arg1: memref<16x32xf32, #tpu.memory_space<vmem>>, %arg2: memref<16x32xf32, #tpu.memory_space<vmem>>, %arg3: memref<16x32xf32, #tpu.memory_space<vmem>>, %arg4: memref<3x32x32xbf16, #tpu.memory_space<vmem>>, %arg5: memref<3x1x32xf32, #tpu.memory_space<vmem>>, %arg6: memref<16x32xbf16, #tpu.memory_space<vmem>>, %arg7: memref<16x32xbf16, #tpu.memory_space<vmem>>, %arg8: memref<16x32xbf16, #tpu.memory_space<vmem>>) attributes {dimension_semantics = [#tpu.dimension_semantics<parallel>], iteration_bounds = array<i64: 1>, scalar_prefetch = 0 : i64, scratch_operands = 0 : i64, tpu.core_type = #tpu.core_type<tc>, window_params = [{transform_indices = @transform_0, window_bounds = array<i64: 16, 32>}, {transform_indices = @transform_1, window_bounds = array<i64: 16, 32>}, {transform_indices = @transform_2, window_bounds = array<i64: 16, 32>}, {pipeline_mode = #tpu.pipeline_mode<synchronous>, transform_indices = @transform_3, window_bounds = array<i64: 3, 32, 32>}, {pipeline_mode = #tpu.pipeline_mode<synchronous>, transform_indices = @transform_4, window_bounds = array<i64: 3, 1, 32>}, {transform_indices = @transform_5, window_bounds = array<i64: 16, 32>}, {transform_indices = @transform_6, window_bounds = array<i64: 16, 32>}, {transform_indices = @transform_7, window_bounds = array<i64: 16, 32>}]} {
    %c0 = arith.constant 0 : index
    %c0_0 = arith.constant 0 : index
    %0 = vector.load %arg1[%c0, %c0_0] : memref<16x32xf32, #tpu.memory_space<vmem>>, vector<16x32xf32>
    %1 = arith.truncf %0 : vector<16x32xf32> to vector<16x32xbf16>
    %c0_1 = arith.constant 0 : index
    %c0_2 = arith.constant 0 : index
    %c0_3 = arith.constant 0 : index
    %2 = vector.load %arg4[%c0_1, %c0_2, %c0_3] : memref<3x32x32xbf16, #tpu.memory_space<vmem>>, vector<1x32x32xbf16>
    %3 = vector.shape_cast %2 : vector<1x32x32xbf16> to vector<32x32xbf16>
    %cst = arith.constant dense<0.000000e+00> : vector<16x32xf32>
    %4 = tpu.matmul %1, %3, %cst {dimension_numbers = #tpu.dot_dimension_numbers<[1], [0], [0], [1], [0, 0, 1, 1], [], []>} : vector<16x32xbf16>, vector<32x32xbf16>, vector<16x32xf32> -> vector<16x32xf32>
    %c0_4 = arith.constant 0 : index
    %c0_5 = arith.constant 0 : index
    %c0_6 = arith.constant 0 : index
    %5 = vector.load %arg5[%c0_4, %c0_5, %c0_6] : memref<3x1x32xf32, #tpu.memory_space<vmem>>, vector<1x1x32xf32>
    %6 = vector.shape_cast %5 : vector<1x1x32xf32> to vector<1x32xf32>
    %7 = vector.broadcast %6 : vector<1x32xf32> to vector<16x32xf32>
    %8 = arith.addf %4, %7 : vector<16x32xf32>
    %9 = arith.truncf %8 : vector<16x32xf32> to vector<16x32xbf16>
    %c0_7 = arith.constant 0 : index
    %c0_8 = arith.constant 0 : index
    %10 = vector.load %arg6[%c0_7, %c0_8] : memref<16x32xbf16, #tpu.memory_space<vmem>>, vector<16x32xbf16>
    tpu.vector_store %arg6[%c0_7, %c0_8], %9 {strides = array<i32>} : memref<16x32xbf16, #tpu.memory_space<vmem>>, vector<16x32xbf16>,
    %c0_9 = arith.constant 0 : index
    %c0_10 = arith.constant 0 : index
    %11 = vector.load %arg2[%c0_9, %c0_10] : memref<16x32xf32, #tpu.memory_space<vmem>>, vector<16x32xf32>
    %12 = arith.truncf %11 : vector<16x32xf32> to vector<16x32xbf16>
    %c1 = arith.constant 1 : index
    %c0_11 = arith.constant 0 : index
    %c0_12 = arith.constant 0 : index
    %13 = vector.load %arg4[%c1, %c0_11, %c0_12] : memref<3x32x32xbf16, #tpu.memory_space<vmem>>, vector<1x32x32xbf16>
    %14 = vector.shape_cast %13 : vector<1x32x32xbf16> to vector<32x32xbf16>
    %cst_13 = arith.constant dense<0.000000e+00> : vector<16x32xf32>
    %15 = tpu.matmul %12, %14, %cst_13 {dimension_numbers = #tpu.dot_dimension_numbers<[1], [0], [0], [1], [0, 0, 1, 1], [], []>} : vector<16x32xbf16>, vector<32x32xbf16>, vector<16x32xf32> -> vector<16x32xf32>
    %c1_14 = arith.constant 1 : index
    %c0_15 = arith.constant 0 : index
    %c0_16 = arith.constant 0 : index
    %16 = vector.load %arg5[%c1_14, %c0_15, %c0_16] : memref<3x1x32xf32, #tpu.memory_space<vmem>>, vector<1x1x32xf32>
    %17 = vector.shape_cast %16 : vector<1x1x32xf32> to vector<1x32xf32>
    %18 = vector.broadcast %17 : vector<1x32xf32> to vector<16x32xf32>
    %19 = arith.addf %15, %18 : vector<16x32xf32>
    %20 = arith.truncf %19 : vector<16x32xf32> to vector<16x32xbf16>
    %c0_17 = arith.constant 0 : index
    %c0_18 = arith.constant 0 : index
    %21 = vector.load %arg7[%c0_17, %c0_18] : memref<16x32xbf16, #tpu.memory_space<vmem>>, vector<16x32xbf16>
    tpu.vector_store %arg7[%c0_17, %c0_18], %20 {strides = array<i32>} : memref<16x32xbf16, #tpu.memory_space<vmem>>, vector<16x32xbf16>,
    %c0_19 = arith.constant 0 : index
    %c0_20 = arith.constant 0 : index
    %22 = vector.load %arg3[%c0_19, %c0_20] : memref<16x32xf32, #tpu.memory_space<vmem>>, vector<16x32xf32>
    %23 = arith.truncf %22 : vector<16x32xf32> to vector<16x32xbf16>
    %c2 = arith.constant 2 : index
    %c0_21 = arith.constant 0 : index
    %c0_22 = arith.constant 0 : index
    %24 = vector.load %arg4[%c2, %c0_21, %c0_22] : memref<3x32x32xbf16, #tpu.memory_space<vmem>>, vector<1x32x32xbf16>
    %25 = vector.shape_cast %24 : vector<1x32x32xbf16> to vector<32x32xbf16>
    %cst_23 = arith.constant dense<0.000000e+00> : vector<16x32xf32>
    %26 = tpu.matmul %23, %25, %cst_23 {dimension_numbers = #tpu.dot_dimension_numbers<[1], [0], [0], [1], [0, 0, 1, 1], [], []>} : vector<16x32xbf16>, vector<32x32xbf16>, vector<16x32xf32> -> vector<16x32xf32>
    %c2_24 = arith.constant 2 : index
    %c0_25 = arith.constant 0 : index
    %c0_26 = arith.constant 0 : index
    %27 = vector.load %arg5[%c2_24, %c0_25, %c0_26] : memref<3x1x32xf32, #tpu.memory_space<vmem>>, vector<1x1x32xf32>
    %28 = vector.shape_cast %27 : vector<1x1x32xf32> to vector<1x32xf32>
    %29 = vector.broadcast %28 : vector<1x32xf32> to vector<16x32xf32>
    %30 = arith.addf %26, %29 : vector<16x32xf32>
    %31 = arith.truncf %30 : vector<16x32xf32> to vector<16x32xbf16>
    %c0_27 = arith.constant 0 : index
    %c0_28 = arith.constant 0 : index
    %32 = vector.load %arg8[%c0_27, %c0_28] : memref<16x32xbf16, #tpu.memory_space<vmem>>, vector<16x32xbf16>
    tpu.vector_store %arg8[%c0_27, %c0_28], %31 {strides = array<i32>} : memref<16x32xbf16, #tpu.memory_space<vmem>>, vector<16x32xbf16>,
    return
  }
  func.func @transform_0(%arg0: i32) -> (i32, i32) {
    %c0_i32 = arith.constant 0 : i32
    %c0_i32_0 = arith.constant 0 : i32
    return %arg0, %c0_i32 : i32, i32
  }
  func.func @transform_1(%arg0: i32) -> (i32, i32) {
    %c0_i32 = arith.constant 0 : i32
    %c0_i32_0 = arith.constant 0 : i32
    return %arg0, %c0_i32 : i32, i32
  }
  func.func @transform_2(%arg0: i32) -> (i32, i32) {
    %c0_i32 = arith.constant 0 : i32
    %c0_i32_0 = arith.constant 0 : i32
    return %arg0, %c0_i32 : i32, i32
  }
  func.func @transform_3(%arg0: i32) -> (i32, i32, i32) {
    %c0_i32 = arith.constant 0 : i32
    %c0_i32_0 = arith.constant 0 : i32
    %c0_i32_1 = arith.constant 0 : i32
    %c0_i32_2 = arith.constant 0 : i32
    return %c0_i32, %c0_i32_0, %c0_i32_1 : i32, i32, i32
  }
  func.func @transform_4(%arg0: i32) -> (i32, i32, i32) {
    %c0_i32 = arith.constant 0 : i32
    %c0_i32_0 = arith.constant 0 : i32
    %c0_i32_1 = arith.constant 0 : i32
    %c0_i32_2 = arith.constant 0 : i32
    return %c0_i32, %c0_i32_0, %c0_i32_1 : i32, i32, i32
  }
  func.func @transform_5(%arg0: i32) -> (i32, i32) {
    %c0_i32 = arith.constant 0 : i32
    %c0_i32_0 = arith.constant 0 : i32
    return %arg0, %c0_i32 : i32, i32
  }
  func.func @transform_6(%arg0: i32) -> (i32, i32) {
    %c0_i32 = arith.constant 0 : i32
    %c0_i32_0 = arith.constant 0 : i32
    return %arg0, %c0_i32 : i32, i32
  }
  func.func @transform_7(%arg0: i32) -> (i32, i32) {
    %c0_i32 = arith.constant 0 : i32
    %c0_i32_0 = arith.constant 0 : i32
    return %arg0, %c0_i32 : i32, i32
  }
}

</mosaic_0001>

<llo_original>
// kernel: tpu_custom_call.1
$region0: #{tpu_custom_call.1}
  #allocation0 [shape = 'u32[]', space=smem, size = 0x4, offset = 0x4, fixed_abs, tag = 'smem constant byte address 0x4 - core index']
  #allocation1 [shape = 'u32[144,128]{1,0:T(1,128)}', space=vmem, size = 0x12000, scoped, tag = 'internal scratch']
  %s0 = inlined_call_operand.hbm [shape: f32[16,32], index: 0, kind: input, shape index: {}]
  %s1 = inlined_call_operand.hbm [shape: f32[16,32], index: 1, kind: input, shape index: {}]
  %s2 = inlined_call_operand.hbm [shape: f32[16,32], index: 2, kind: input, shape index: {}]
  %s3 = inlined_call_operand.hbm [shape: bf16[3,32,32], index: 3, kind: input, shape index: {}]
  %s4 = inlined_call_operand.vmem [shape: f32[3,1,32], index: 4, kind: input, shape index: {}]
  %s5 = inlined_call_operand.hbm [shape: bf16[16,32], index: 5, kind: output, shape index: {0}]
  %s6 = inlined_call_operand.hbm [shape: bf16[16,32], index: 6, kind: output, shape index: {1}]
  %s7 = inlined_call_operand.hbm [shape: bf16[16,32], index: 7, kind: output, shape index: {2}]
  %8 = xla_tuple %s5, %s6, %s7
  %s9 = sld [smem:[#allocation0]]
  $region62: #{tpu_custom_call.1} parent=0
    _
  %s11 = ssub.s32 1, %s9
  %s12 = scalar_select 0, %s11, %s9
  $region1: #{tpu_custom_call.1} parent=0
    #allocation2 [shape = 'u8[8192]{0}', space=vmem, size = 0x2000, scoped, tag = 'input window, operand 0, single buffered']
    #allocation3 [shape = 's32[1]{0}', space=sflag, size = 0x4, scoped, tag = 'scoped memory for tpu_custom_call.1']
    #allocation4 [shape = 's32[1]{0}', space=sflag, size = 0x4, scoped, tag = 'scoped memory for tpu_custom_call.1']
    #allocation5 [shape = 'u8[8192]{0}', space=vmem, size = 0x2000, scoped, tag = 'input window, operand 1, single buffered']
    #allocation6 [shape = 's32[1]{0}', space=sflag, size = 0x4, scoped, tag = 'scoped memory for tpu_custom_call.1']
    #allocation7 [shape = 'u8[8192]{0}', space=vmem, size = 0x2000, scoped, tag = 'input window, operand 2, single buffered']
    #allocation8 [shape = 'u8[24576]{0}', space=vmem, size = 0x6000, scoped, tag = 'input window, operand 3, single buffered']
    #allocation9 [shape = 's32[1]{0}', space=sflag, size = 0x4, scoped, tag = 'scoped memory for tpu_custom_call.1']
    #allocation10 [shape = 'u8[4096]{0}', space=vmem, size = 0x1000, scoped, tag = 'output window, operand 0, single buffered']
    #allocation11 [shape = 'u8[4096]{0}', space=vmem, size = 0x1000, scoped, tag = 'output window, operand 1, single buffered']
    #allocation12 [shape = 's32[1]{0}', space=sflag, size = 0x4, scoped, tag = 'scoped memory for tpu_custom_call.1']
    #allocation13 [shape = 'u8[4096]{0}', space=vmem, size = 0x1000, scoped, tag = 'output window, operand 2, single buffered']
    %13 = vsyncpa [#allocation3], 0
    %14 = vsyncpa [#allocation6], 0
    %15 = vsyncpa [#allocation9], 0
    %16 = vsyncpa [#allocation4], 0
    %17 = vsyncpa [#allocation12], 0
    // Predicated region
    $region2: #{tpu_custom_call.1} parent=1 // pred_check
      _
    $region3: #{tpu_custom_call.1} parent=1 // pred_check_branch
      %19 = sbr.rel (0) target = $region5
    $region4: #{tpu_custom_call.1} parent=1 // pred_region
      %s21 = ssub.s32 256, 256
      %22 = vsyncadd [#allocation3], %s21
      %s23 = sshll.u32 [#allocation2], 4
      %s24 = int_to_ptr.vmem [resolvable:$true] %s23
      %29 = dma.hbm_to_vmem [thread:$0]  %s0, 256, %s24, [#allocation3], 128, 128, 8
    $region5: #{tpu_custom_call.1} parent=1 // pred_fallthru
      _
    // Predicated region
    $region6: #{tpu_custom_call.1} parent=1 // pred_check
      _
    $region7: #{tpu_custom_call.1} parent=1 // pred_check_branch
      %31 = sbr.rel (0) target = $region9
    $region8: #{tpu_custom_call.1} parent=1 // pred_region
      %s33 = ssub.s32 256, 256
      %34 = vsyncadd [#allocation6], %s33
      %s35 = sshll.u32 [#allocation5], 4
      %s36 = int_to_ptr.vmem [resolvable:$true] %s35
      %41 = dma.hbm_to_vmem [thread:$0]  %s1, 256, %s36, [#allocation6], 128, 128, 8
    $region9: #{tpu_custom_call.1} parent=1 // pred_fallthru
      _
    // Predicated region
    $region10: #{tpu_custom_call.1} parent=1 // pred_check
      _
    $region11: #{tpu_custom_call.1} parent=1 // pred_check_branch
      %43 = sbr.rel (0) target = $region13
    $region12: #{tpu_custom_call.1} parent=1 // pred_region
      %s45 = ssub.s32 256, 256
      %46 = vsyncadd [#allocation6], %s45
      %s47 = sshll.u32 [#allocation7], 4
      %s48 = int_to_ptr.vmem [resolvable:$true] %s47
      %53 = dma.hbm_to_vmem [thread:$0]  %s2, 256, %s48, [#allocation6], 128, 128, 8
    $region13: #{tpu_custom_call.1} parent=1 // pred_fallthru
      _
    // Predicated region
    $region14: #{tpu_custom_call.1} parent=1 // pred_check
      _
    $region15: #{tpu_custom_call.1} parent=1 // pred_check_branch
      %55 = sbr.rel (0) target = $region17
    $region16: #{tpu_custom_call.1} parent=1 // pred_region
      %s57 = ssub.s32 768, 768
      %58 = vsyncadd [#allocation9], %s57
      %s59 = sshll.u32 [#allocation8], 4
      %s60 = int_to_ptr.vmem [resolvable:$true] %s59
      %65 = dma.hbm_to_vmem [thread:$0]  %s3, 768, %s60, [#allocation9], 64, 64, 4
    $region17: #{tpu_custom_call.1} parent=1 // pred_fallthru
      _
    // Predicated region
    $region18: #{tpu_custom_call.1} parent=1 // pred_check
      _
    $region19: #{tpu_custom_call.1} parent=1 // pred_check_branch
      %67 = sbr.rel (0) target = $region21
    $region20: #{tpu_custom_call.1} parent=1 // pred_region
      _
    $region21: #{tpu_custom_call.1} parent=1 // pred_fallthru
      _
    // Predicated region
    $region22: #{tpu_custom_call.1} parent=1 // pred_check
      _
    $region23: #{tpu_custom_call.1} parent=1 // pred_check_branch
      %69 = sbr.rel (0) target = $region25
    $region24: #{tpu_custom_call.1} parent=1 // pred_region
      %70 = dma.done [#allocation3], 256
    $region25: #{tpu_custom_call.1} parent=1 // pred_fallthru
      _
    // Predicated region
    $region26: #{tpu_custom_call.1} parent=1 // pred_check
      _
    $region27: #{tpu_custom_call.1} parent=1 // pred_check_branch
      %72 = sbr.rel (0) target = $region29
    $region28: #{tpu_custom_call.1} parent=1 // pred_region
      %73 = dma.done [#allocation6], 256
    $region29: #{tpu_custom_call.1} parent=1 // pred_fallthru
      _
    // Predicated region
    $region30: #{tpu_custom_call.1} parent=1 // pred_check
      _
    $region31: #{tpu_custom_call.1} parent=1 // pred_check_branch
      %75 = sbr.rel (0) target = $region33
    $region32: #{tpu_custom_call.1} parent=1 // pred_region
      %76 = dma.done [#allocation6], 256
    $region33: #{tpu_custom_call.1} parent=1 // pred_fallthru
      _
    // Predicated region
    $region34: #{tpu_custom_call.1} parent=1 // pred_check
      _
    $region35: #{tpu_custom_call.1} parent=1 // pred_check_branch
      %78 = sbr.rel (0) target = $region37
    $region36: #{tpu_custom_call.1} parent=1 // pred_region
      %79 = dma.done [#allocation9], 768
    $region37: #{tpu_custom_call.1} parent=1 // pred_fallthru
      _
    %v81 = vld [vmem:[#allocation2] sm:$0xff]
    %v82 = vld [vmem:[#allocation2 + $0x8] sm:$0xff]
    %v83 = vpack.c.bf16 %v82, %v81
    %v84 = vld [vmem:[#allocation8] sm:$0xf]
    %v85 = vld [vmem:[#allocation8 + $0x4] sm:$0xf]
    %v86 = vld [vmem:[#allocation8 + $0x8] sm:$0xf]
    %v87 = vld [vmem:[#allocation8 + $0xc] sm:$0xf]
    %v88 = vld [vmem:[%s4] sm:$0x1]
    %v90 = vlaneseq
    %v91 = vshrl.u32 %v90, 7
    %v92 = vsub.s32 0, %v91
    %v93 = vrot.slane %v88, %v92
    %v99 = vunpack.c.l.b16 %v84
    %v100 = vunpack.c.l.b16 %v85
    %v101 = vunpack.c.l.b16 %v86
    %v102 = vunpack.c.l.b16 %v87
    %v103 = vpack.c.b16 %v100, %v99
    %v104 = vpack.c.b16 %v102, %v101
    %vm107 = vcmask 261120
    %v109 = vsel %vm107, %v83, 0
    %111 = vmatprep.subr.bf16.mxu0 0
    %112 = vmatpush1.bf16.msra.mxu0 %v103
    %113 = vmatprep.subr.bf16.mxu0 0
    %114 = vmatpush1.bf16.msra.mxu0 %v104
    %115 = vmatprep.subr.bf16.mxu0 0
    %116 = vmatpush1.bf16.msra.mxu0 0
    %117 = vmatprep.subr.bf16.mxu0 0
    %118 = vmatpush1.bf16.msra.mxu0 0
    %119 = vmatprep.subr.bf16.mxu0 0
    %120 = vmatpush1.bf16.msra.mxu0 0
    %121 = vmatprep.subr.bf16.mxu0 0
    %122 = vmatpush1.bf16.msra.mxu0 0
    %123 = vmatprep.subr.bf16.mxu0 0
    %124 = vmatpush1.bf16.msra.mxu0 0
    %125 = vmatprep.subr.bf16.mxu0 0
    %126 = vmatpush1.bf16.msra.mxu0 0
    %127 = vmatprep.subr.bf16.mxu0 0
    %128 = vmatpush1.bf16.msra.mxu0 0
    %129 = vmatprep.subr.bf16.mxu0 0
    %130 = vmatpush1.bf16.msra.mxu0 0
    %131 = vmatprep.subr.bf16.mxu0 0
    %132 = vmatpush1.bf16.msra.mxu0 0
    %133 = vmatprep.subr.bf16.mxu0 0
    %134 = vmatpush1.bf16.msra.mxu0 0
    %135 = vmatprep.subr.bf16.mxu0 0
    %136 = vmatpush1.bf16.msra.mxu0 0
    %137 = vmatprep.subr.bf16.mxu0 0
    %138 = vmatpush1.bf16.msra.mxu0 0
    %139 = vmatprep.subr.bf16.mxu0 0
    %140 = vmatpush1.bf16.msra.mxu0 0
    %141 = vmatprep.subr.bf16.mxu0 0
    %142 = vmatpush1.bf16.msra.mxu0 0
    %143 = vmatprep.mubr.bf16.mxu0 0
    %144 = vmatmul.mubr.bf16.gmra.mrb[0].mxu0 %v109
    %v145 = vpop.f32.mrb[0].mxu0
    %v146 = vadd.f32 %v93, %v145
    %v147 = vpop.f32.mrb[0].mxu0
    %v148 = vpop.f32.mrb[0].mxu0
    %v149 = vadd.f32 %v93, %v148
    %v150 = vpop.f32.mrb[0].mxu0
    %151 = vdwg.mxu0
    %v152 = vpack.c.bf16 %v149, %v146
    %v154 = vunpack.c.l.b16 %v152
    %v155 = vunpack.c.h.b16 %v152
    %v156 = vpack.c.b16 %v154, %v154
    %v157 = vpack.c.b16 %v155, %v155
    %vm160 = vcmask 257024
    %161 = vst.msk [vmem:[#allocation10] sm:$0xf] %vm160, %v156
    %162 = vst.msk [vmem:[#allocation10 + $0x4] sm:$0xf] %vm160, %v157
    %v163 = vld [vmem:[#allocation5] sm:$0xff]
    %v164 = vld [vmem:[#allocation5 + $0x8] sm:$0xff]
    %v165 = vpack.c.bf16 %v164, %v163
    %s166 = scalar_lea.vmem [#allocation8], 16
    %v167 = vld [vmem:[%s166] sm:$0xf]
    %v168 = vld [vmem:[%s166 + $0x4] sm:$0xf]
    %v169 = vld [vmem:[%s166 + $0x8] sm:$0xf]
    %v170 = vld [vmem:[%s166 + $0xc] sm:$0xf]
    %s171 = scalar_lea.vmem %s4, 1
    %v172 = vld [vmem:[%s171] sm:$0x1]
    %v174 = vlaneseq
    %v175 = vshrl.u32 %v174, 7
    %v176 = vsub.s32 0, %v175
    %v177 = vrot.slane %v172, %v176
    %v183 = vunpack.c.l.b16 %v167
    %v184 = vunpack.c.l.b16 %v168
    %v185 = vunpack.c.l.b16 %v169
    %v186 = vunpack.c.l.b16 %v170
    %v187 = vpack.c.b16 %v184, %v183
    %v188 = vpack.c.b16 %v186, %v185
    %v192 = vsel %vm107, %v165, 0
    %194 = vmatprep.subr.bf16.mxu0 0
    %195 = vmatpush1.bf16.msra.mxu0 %v187
    %196 = vmatprep.subr.bf16.mxu0 0
    %197 = vmatpush1.bf16.msra.mxu0 %v188
    %198 = vmatprep.subr.bf16.mxu0 0
    %199 = vmatpush1.bf16.msra.mxu0 0
    %200 = vmatprep.subr.bf16.mxu0 0
    %201 = vmatpush1.bf16.msra.mxu0 0
    %202 = vmatprep.subr.bf16.mxu0 0
    %203 = vmatpush1.bf16.msra.mxu0 0
    %204 = vmatprep.subr.bf16.mxu0 0
    %205 = vmatpush1.bf16.msra.mxu0 0
    %206 = vmatprep.subr.bf16.mxu0 0
    %207 = vmatpush1.bf16.msra.mxu0 0
    %208 = vmatprep.subr.bf16.mxu0 0
    %209 = vmatpush1.bf16.msra.mxu0 0
    %210 = vmatprep.subr.bf16.mxu0 0
    %211 = vmatpush1.bf16.msra.mxu0 0
    %212 = vmatprep.subr.bf16.mxu0 0
    %213 = vmatpush1.bf16.msra.mxu0 0
    %214 = vmatprep.subr.bf16.mxu0 0
    %215 = vmatpush1.bf16.msra.mxu0 0
    %216 = vmatprep.subr.bf16.mxu0 0
    %217 = vmatpush1.bf16.msra.mxu0 0
    %218 = vmatprep.subr.bf16.mxu0 0
    %219 = vmatpush1.bf16.msra.mxu0 0
    %220 = vmatprep.subr.bf16.mxu0 0
    %221 = vmatpush1.bf16.msra.mxu0 0
    %222 = vmatprep.subr.bf16.mxu0 0
    %223 = vmatpush1.bf16.msra.mxu0 0
    %224 = vmatprep.subr.bf16.mxu0 0
    %225 = vmatpush1.bf16.msra.mxu0 0
    %226 = vmatprep.mubr.bf16.mxu0 0
    %227 = vmatmul.mubr.bf16.gmra.mrb[0].mxu0 %v192
    %v228 = vpop.f32.mrb[0].mxu0
    %v229 = vadd.f32 %v177, %v228
    %v230 = vpop.f32.mrb[0].mxu0
    %v231 = vpop.f32.mrb[0].mxu0
    %v232 = vadd.f32 %v177, %v231
    %v233 = vpop.f32.mrb[0].mxu0
    %234 = vdwg.mxu0
    %v235 = vpack.c.bf16 %v232, %v229
    %v237 = vunpack.c.l.b16 %v235
    %v238 = vunpack.c.h.b16 %v235
    %v239 = vpack.c.b16 %v237, %v237
    %v240 = vpack.c.b16 %v238, %v238
    %243 = vst.msk [vmem:[#allocation11] sm:$0xf] %vm160, %v239
    %244 = vst.msk [vmem:[#allocation11 + $0x4] sm:$0xf] %vm160, %v240
    %v245 = vld [vmem:[#allocation7] sm:$0xff]
    %v246 = vld [vmem:[#allocation7 + $0x8] sm:$0xff]
    %v247 = vpack.c.bf16 %v246, %v245
    %s248 = scalar_lea.vmem [#allocation8], 32
    %v249 = vld [vmem:[%s248] sm:$0xf]
    %v250 = vld [vmem:[%s248 + $0x4] sm:$0xf]
    %v251 = vld [vmem:[%s248 + $0x8] sm:$0xf]
    %v252 = vld [vmem:[%s248 + $0xc] sm:$0xf]
    %s253 = scalar_lea.vmem %s4, 2
    %v254 = vld [vmem:[%s253] sm:$0x1]
    %v256 = vlaneseq
    %v257 = vshrl.u32 %v256, 7
    %v258 = vsub.s32 0, %v257
    %v259 = vrot.slane %v254, %v258
    %v265 = vunpack.c.l.b16 %v249
    %v266 = vunpack.c.l.b16 %v250
    %v267 = vunpack.c.l.b16 %v251
    %v268 = vunpack.c.l.b16 %v252
    %v269 = vpack.c.b16 %v266, %v265
    %v270 = vpack.c.b16 %v268, %v267
    %v274 = vsel %vm107, %v247, 0
    %276 = vmatprep.subr.bf16.mxu0 0
    %277 = vmatpush1.bf16.msra.mxu0 %v269
    %278 = vmatprep.subr.bf16.mxu0 0
    %279 = vmatpush1.bf16.msra.mxu0 %v270
    %280 = vmatprep.subr.bf16.mxu0 0
    %281 = vmatpush1.bf16.msra.mxu0 0
    %282 = vmatprep.subr.bf16.mxu0 0
    %283 = vmatpush1.bf16.msra.mxu0 0
    %284 = vmatprep.subr.bf16.mxu0 0
    %285 = vmatpush1.bf16.msra.mxu0 0
    %286 = vmatprep.subr.bf16.mxu0 0
    %287 = vmatpush1.bf16.msra.mxu0 0
    %288 = vmatprep.subr.bf16.mxu0 0
    %289 = vmatpush1.bf16.msra.mxu0 0
    %290 = vmatprep.subr.bf16.mxu0 0
    %291 = vmatpush1.bf16.msra.mxu0 0
    %292 = vmatprep.subr.bf16.mxu0 0
    %293 = vmatpush1.bf16.msra.mxu0 0
    %294 = vmatprep.subr.bf16.mxu0 0
    %295 = vmatpush1.bf16.msra.mxu0 0
    %296 = vmatprep.subr.bf16.mxu0 0
    %297 = vmatpush1.bf16.msra.mxu0 0
    %298 = vmatprep.subr.bf16.mxu0 0
    %299 = vmatpush1.bf16.msra.mxu0 0
    %300 = vmatprep.subr.bf16.mxu0 0
    %301 = vmatpush1.bf16.msra.mxu0 0
    %302 = vmatprep.subr.bf16.mxu0 0
    %303 = vmatpush1.bf16.msra.mxu0 0
    %304 = vmatprep.subr.bf16.mxu0 0
    %305 = vmatpush1.bf16.msra.mxu0 0
    %306 = vmatprep.subr.bf16.mxu0 0
    %307 = vmatpush1.bf16.msra.mxu0 0
    %308 = vmatprep.mubr.bf16.mxu0 0
    %309 = vmatmul.mubr.bf16.gmra.mrb[0].mxu0 %v274
    %v310 = vpop.f32.mrb[0].mxu0
    %v311 = vadd.f32 %v259, %v310
    %v312 = vpop.f32.mrb[0].mxu0
    %v313 = vpop.f32.mrb[0].mxu0
    %v314 = vadd.f32 %v259, %v313
    %v315 = vpop.f32.mrb[0].mxu0
    %316 = vdwg.mxu0
    %v317 = vpack.c.bf16 %v314, %v311
    %v319 = vunpack.c.l.b16 %v317
    %v320 = vunpack.c.h.b16 %v317
    %v321 = vpack.c.b16 %v319, %v319
    %v322 = vpack.c.b16 %v320, %v320
    %325 = vst.msk [vmem:[#allocation13] sm:$0xf] %vm160, %v321
    %326 = vst.msk [vmem:[#allocation13 + $0x4] sm:$0xf] %vm160, %v322
    // Predicated region
    $region38: #{tpu_custom_call.1} parent=1 // pred_check
      _
    $region39: #{tpu_custom_call.1} parent=1 // pred_check_branch
      %328 = sbr.rel (0) target = $region41
    $region40: #{tpu_custom_call.1} parent=1 // pred_region
      %s330 = ssub.s32 128, 128
      %331 = vsyncadd [#allocation4], %s330
      %s332 = sshll.u32 [#allocation10], 4
      %s333 = int_to_ptr.vmem [resolvable:$true] %s332
      %338 = dma.vmem_to_hbm [thread:$0]  %s333, 128, %s5, [#allocation4], 64, 64, 4
    $region41: #{tpu_custom_call.1} parent=1 // pred_fallthru
      _
    // Predicated region
    $region42: #{tpu_custom_call.1} parent=1 // pred_check
      _
    $region43: #{tpu_custom_call.1} parent=1 // pred_check_branch
      %340 = sbr.rel (0) target = $region45
    $region44: #{tpu_custom_call.1} parent=1 // pred_region
      %s342 = ssub.s32 128, 128
      %343 = vsyncadd [#allocation12], %s342
      %s344 = sshll.u32 [#allocation11], 4
      %s345 = int_to_ptr.vmem [resolvable:$true] %s344
      %350 = dma.vmem_to_hbm [thread:$0]  %s345, 128, %s6, [#allocation12], 64, 64, 4
    $region45: #{tpu_custom_call.1} parent=1 // pred_fallthru
      _
    // Predicated region
    $region46: #{tpu_custom_call.1} parent=1 // pred_check
      _
    $region47: #{tpu_custom_call.1} parent=1 // pred_check_branch
      %352 = sbr.rel (0) target = $region49
    $region48: #{tpu_custom_call.1} parent=1 // pred_region
      %s354 = ssub.s32 128, 128
      %355 = vsyncadd [#allocation12], %s354
      %s356 = sshll.u32 [#allocation13], 4
      %s357 = int_to_ptr.vmem [resolvable:$true] %s356
      %362 = dma.vmem_to_hbm [thread:$0]  %s357, 128, %s7, [#allocation12], 64, 64, 4
    $region49: #{tpu_custom_call.1} parent=1 // pred_fallthru
      _
    // Predicated region
    $region50: #{tpu_custom_call.1} parent=1 // pred_check
      _
    $region51: #{tpu_custom_call.1} parent=1 // pred_check_branch
      %364 = sbr.rel (0) target = $region53
    $region52: #{tpu_custom_call.1} parent=1 // pred_region
      %365 = dma.done [#allocation4], 128
    $region53: #{tpu_custom_call.1} parent=1 // pred_fallthru
      _
    // Predicated region
    $region54: #{tpu_custom_call.1} parent=1 // pred_check
      _
    $region55: #{tpu_custom_call.1} parent=1 // pred_check_branch
      %367 = sbr.rel (0) target = $region57
    $region56: #{tpu_custom_call.1} parent=1 // pred_region
      %368 = dma.done [#allocation12], 128
    $region57: #{tpu_custom_call.1} parent=1 // pred_fallthru
      _
    // Predicated region
    $region58: #{tpu_custom_call.1} parent=1 // pred_check
      _
    $region59: #{tpu_custom_call.1} parent=1 // pred_check_branch
      %370 = sbr.rel (0) target = $region61
    $region60: #{tpu_custom_call.1} parent=1 // pred_region
      %371 = dma.done [#allocation12], 128
    $region61: #{tpu_custom_call.1} parent=1 // pred_fallthru
      _
    %372 = vsyncpa [#allocation3], 1
    %373 = vsyncpa [#allocation6], 1
    %374 = vsyncpa [#allocation9], 1
    %375 = vsyncpa [#allocation4], 1
    %376 = vsyncpa [#allocation12], 1

</llo_original>
